<compile_context>
chip_gen: v7x
topology: tpu7x:2x2x1
jax: 0.10.0
libtpu: 0.0.40
codegen_flags: <defaults>
</compile_context>

<pallas_src>
import functools

import jax
import jax.numpy as jnp
from jax.experimental import pallas as pl
from jax.experimental.pallas import tpu as pltpu

R, C = 16, 16            # config.R, config.C
RC = R * C
HIDDEN = 32              # lin1 output width (hard-coded 32 in QHead)
TB_MAX = 2048            # batch tile: 2 buffers * 2048 * 1024 * 4B = 16 MiB VMEM
TARGET_TILES = 4         # aim for >=4 grid steps (2 per v7x TensorCore)
VMEM_LIMIT_BYTES = 48 * 1024 * 1024
BN_EPS = 1e-5


def _cdiv(a, b):
    return -(-a // b)


def _round_up(n, m):
    return ((n + m - 1) // m) * m


def _choose_tile(B, tb_max=TB_MAX, target_tiles=TARGET_TILES):
    """Batch tile: full batch when B <= 8, otherwise a multiple of 8 sublanes
    (128 when B is large) sized so there are >= target_tiles grid steps."""
    if B <= 8:
        return max(B, 1)
    granule = 128 if B >= 128 * target_tiles else 8
    return min(tb_max, _round_up(_cdiv(B, target_tiles), granule))


def qhead_kernel(x_ref, w1_ref, b1_ref, w2_ref, scal_ref, q_ref, *, cin, rc):
    # x_ref:    (TB, cin*rc)  f32  VMEM (pipelined batch tile, streamed as-is)
    # w1_ref:   (rc, 32)      bf16 VMEM (resident)  -- lin1.weight.T
    # b1_ref:   (1, 32)       f32  VMEM (resident)  -- lin1.bias
    # w2_ref:   (8, 32)       f32  VMEM (resident)  -- scalar.weight in row 0
    # scal_ref: (cin+2,)      f32  SMEM -- [wc_eff[0..cin-1], bias_eff, scalar_bias]
    # q_ref:    (1, 1, TB)    f32  VMEM -- lane-dense output row

    # 1x1 conv with eval-mode BatchNorm + conv bias folded into (cin+1)
    # scalars: unrolled f32 multiply-accumulate over static lane slices on the
    # VPU (~9 elem-ops/element; hides under the f32 HBM stream of x).
    h = x_ref[:, 0:rc] * scal_ref[0]
    for c in range(1, cin):
        h = h + x_ref[:, c * rc:(c + 1) * rc] * scal_ref[c]
    h = jnp.maximum(h + scal_ref[cin], 0.0)                      # bias_eff + ReLU

    # lin1 on the MXU in bf16 with f32 accumulation: (TB, rc) @ (rc, 32).
    z = jnp.dot(h.astype(jnp.bfloat16), w1_ref[...],
                preferred_element_type=jnp.float32) + b1_ref[...]
    z = jnp.maximum(z, 0.0)

    # Scalar head emitted directly as a lane-dense row: (8,32) x (TB,32)^T.
    # Tiny contraction (32); any vxpose of z lands on the otherwise-idle XLU.
    q8 = jnp.einsum('oh,bh->ob', w2_ref[...], z,
                    preferred_element_type=jnp.float32)          # (8, TB)
    q_ref[0, :, :] = jnp.tanh(q8[0:1, :] + scal_ref[cin + 1])


def qhead_forward(x, params, *, tb_max=TB_MAX):
    """x: (B, Cin, R, C) float32 (PyTorch NCHW).  Returns (B, 1) float32."""
    B, cin, H, W = x.shape
    rc = H * W
    (wc, conv_b, gamma, beta, run_mean, run_var, w1, b1, w2, b2) = params

    f32 = lambda a: jnp.asarray(a, jnp.float32)

    # Fold eval-mode BatchNorm1d(1) and the conv bias into the conv weights.
    scale = f32(gamma) * jax.lax.rsqrt(f32(run_var) + jnp.float32(BN_EPS))
    wc_eff = f32(wc).reshape(-1) * scale                               # (cin,)
    bias_eff = (f32(conv_b) - f32(run_mean)) * scale + f32(beta)       # ()
    scal = jnp.concatenate(
        [wc_eff, jnp.stack([bias_eff, f32(b2).reshape(())])])          # (cin+2,)

    # Lane-dense (B, cin*rc) view of x: a free contiguous reshape.  No cast,
    # no pad -- the last tile may be partial; its garbage rows are sliced off.
    x_flat = x.reshape(B, cin * rc)
    tb = _choose_tile(B, tb_max)
    ngrid = _cdiv(B, tb)

    w1_r = jnp.asarray(w1, jnp.bfloat16)                               # (rc, 32)
    b1_r = f32(b1).reshape(1, HIDDEN)
    w2_pad = jnp.zeros((8, HIDDEN), jnp.float32).at[0].set(f32(w2).reshape(-1))

    cost = pl.CostEstimate(
        flops=B * (2 * cin * rc + 2 * rc * HIDDEN + 2 * HIDDEN * 8),
        transcendentals=B,
        bytes_accessed=(B * cin * rc * 4
                        + rc * HIDDEN * 2
                        + (HIDDEN + 8 * HIDDEN + cin + 2) * 4
                        + ngrid * tb * 4),
    )

    out = pl.pallas_call(
        functools.partial(qhead_kernel, cin=cin, rc=rc),
        out_shape=jax.ShapeDtypeStruct((ngrid, 1, tb), jnp.float32),
        grid=(ngrid,),
        in_specs=[
            pl.BlockSpec((tb, cin * rc), lambda i: (i, 0)),      # x: pipelined tiles
            pl.BlockSpec((rc, HIDDEN), lambda i: (0, 0)),        # w1: resident bf16
            pl.BlockSpec((1, HIDDEN), lambda i: (0, 0)),         # b1: resident
            pl.BlockSpec((8, HIDDEN), lambda i: (0, 0)),         # w2: resident
            pl.BlockSpec(memory_space=pltpu.MemorySpace.SMEM),   # folded scalars
        ],
        out_specs=pl.BlockSpec((1, 1, tb), lambda i: (i, 0, 0)),
        compiler_params=pltpu.CompilerParams(
            dimension_semantics=("parallel",),       # batch tiles across v7x cores
            vmem_limit_bytes=VMEM_LIMIT_BYTES),
        cost_estimate=cost,
    )(x_flat, w1_r, b1_r, w2_pad, scal)

    return out.reshape(ngrid * tb)[:B].reshape(B, 1)


def _reference(x, params):
    (wc, conv_b, gamma, beta, run_mean, run_var, w1, b1, w2, b2) = params
    B = x.shape[0]
    h = jnp.einsum('bchw,c->bhw', x, wc).reshape(B, RC) + conv_b
    h = (h - run_mean) * jax.lax.rsqrt(run_var + BN_EPS) * gamma + beta
    h = jnp.maximum(h, 0.0)
    z = jnp.maximum(h @ w1 + b1, 0.0)
    return jnp.tanh(z @ w2 + b2)


if __name__ == "__main__":
    key = jax.random.PRNGKey(0)
    Cin = 4
    ks = jax.random.split(key, 6)

    # Deterministic synthetic parameters (shapes from QHead.__init__)
    wc = jax.random.normal(ks[1], (Cin,), jnp.float32) * 0.1       # conv1.weight (1,Cin,1,1) squeezed
    conv_b = jnp.float32(0.05)                                     # conv1.bias
    gamma = jnp.float32(1.2)                                       # bn1.weight
    beta = jnp.float32(-0.1)                                       # bn1.bias
    run_mean = jnp.float32(0.0)                                    # bn1.running_mean
    run_var = jnp.float32(1.0)                                     # bn1.running_var
    w1 = jax.random.normal(ks[2], (RC, HIDDEN), jnp.float32) * 0.05    # lin1.weight.T
    b1 = jax.random.normal(ks[3], (HIDDEN,), jnp.float32) * 0.05       # lin1.bias
    w2 = jax.random.normal(ks[4], (HIDDEN, 1), jnp.float32) * 0.1      # scalar.weight.T
    b2 = jnp.float32(0.02)                                             # scalar.bias
    params = (wc, conv_b, gamma, beta, run_mean, run_var, w1, b1, w2, b2)

    # Primary small-shape check (single full-batch tile).
    B = 2
    x = jax.random.normal(ks[0], (B, Cin, R, C), jnp.float32)
    q = jax.block_until_ready(qhead_forward(x, params))
    q_exp = _reference(x, params)
    assert q.shape == (B, 1)
    assert jnp.allclose(q, q_exp, atol=2e-2), (q, q_exp)

    # Secondary check exercising multiple grid steps + a partial last tile.
    B2 = 20
    x2 = jax.random.normal(ks[5], (B2, Cin, R, C), jnp.float32)
    q2 = jax.block_until_ready(qhead_forward(x2, params))
    assert q2.shape == (B2, 1)
    assert jnp.allclose(q2, _reference(x2, params), atol=2e-2), (q2,)

    print("KERNEL_OK")
</pallas_src>

<mosaic_0001>
module attributes {stable_mosaic.version = 11 : i64} {
  func.func @qhead_kernel(%arg0: i32, %arg1: memref<2x1024xf32, #tpu.memory_space<vmem>>, %arg2: memref<256x32xbf16, #tpu.memory_space<vmem>>, %arg3: memref<1x32xf32, #tpu.memory_space<vmem>>, %arg4: memref<8x32xf32, #tpu.memory_space<vmem>>, %arg5: memref<6xf32, #tpu.memory_space<smem>>, %arg6: memref<1x1x2xf32, #tpu.memory_space<vmem>>) attributes {dimension_semantics = [#tpu.dimension_semantics<parallel>], iteration_bounds = array<i64: 1>, scalar_prefetch = 0 : i64, scratch_operands = 0 : i64, tpu.core_type = #tpu.core_type<tc>, window_params = [{transform_indices = @transform_0, window_bounds = array<i64: 2, 1024>}, {pipeline_mode = #tpu.pipeline_mode<synchronous>, transform_indices = @transform_1, window_bounds = array<i64: 256, 32>}, {pipeline_mode = #tpu.pipeline_mode<synchronous>, transform_indices = @transform_2, window_bounds = array<i64: 1, 32>}, {pipeline_mode = #tpu.pipeline_mode<synchronous>, transform_indices = @transform_3, window_bounds = array<i64: 8, 32>}, {transform_indices = @transform_4, window_bounds = array<i64: 6>}, {transform_indices = @transform_5, window_bounds = array<i64: 1, 1, 2>}]} {
    %c0 = arith.constant 0 : index
    %c0_0 = arith.constant 0 : index
    %0 = vector.load %arg1[%c0, %c0_0] : memref<2x1024xf32, #tpu.memory_space<vmem>>, vector<2x256xf32>
    %c0_1 = arith.constant 0 : index
    %1 = memref.load %arg5[%c0_1] : memref<6xf32, #tpu.memory_space<smem>>
    %2 = vector.broadcast %1 : f32 to vector<2x256xf32>
    %3 = arith.mulf %0, %2 : vector<2x256xf32>
    %c0_2 = arith.constant 0 : index
    %c256 = arith.constant 256 : index
    %4 = vector.load %arg1[%c0_2, %c256] : memref<2x1024xf32, #tpu.memory_space<vmem>>, vector<2x256xf32>
    %c1 = arith.constant 1 : index
    %5 = memref.load %arg5[%c1] : memref<6xf32, #tpu.memory_space<smem>>
    %6 = vector.broadcast %5 : f32 to vector<2x256xf32>
    %7 = arith.mulf %4, %6 : vector<2x256xf32>
    %8 = arith.addf %3, %7 : vector<2x256xf32>
    %c0_3 = arith.constant 0 : index
    %c512 = arith.constant 512 : index
    %9 = vector.load %arg1[%c0_3, %c512] : memref<2x1024xf32, #tpu.memory_space<vmem>>, vector<2x256xf32>
    %c2 = arith.constant 2 : index
    %10 = memref.load %arg5[%c2] : memref<6xf32, #tpu.memory_space<smem>>
    %11 = vector.broadcast %10 : f32 to vector<2x256xf32>
    %12 = arith.mulf %9, %11 : vector<2x256xf32>
    %13 = arith.addf %8, %12 : vector<2x256xf32>
    %c0_4 = arith.constant 0 : index
    %c768 = arith.constant 768 : index
    %14 = vector.load %arg1[%c0_4, %c768] : memref<2x1024xf32, #tpu.memory_space<vmem>>, vector<2x256xf32>
    %c3 = arith.constant 3 : index
    %15 = memref.load %arg5[%c3] : memref<6xf32, #tpu.memory_space<smem>>
    %16 = vector.broadcast %15 : f32 to vector<2x256xf32>
    %17 = arith.mulf %14, %16 : vector<2x256xf32>
    %18 = arith.addf %13, %17 : vector<2x256xf32>
    %c4 = arith.constant 4 : index
    %19 = memref.load %arg5[%c4] : memref<6xf32, #tpu.memory_space<smem>>
    %20 = vector.broadcast %19 : f32 to vector<2x256xf32>
    %21 = arith.addf %18, %20 : vector<2x256xf32>
    %cst = arith.constant 0.000000e+00 : f32
    %22 = vector.broadcast %cst : f32 to vector<2x256xf32>
    %23 = arith.maximumf %21, %22 : vector<2x256xf32>
    %24 = arith.truncf %23 : vector<2x256xf32> to vector<2x256xbf16>
    %c0_5 = arith.constant 0 : index
    %c0_6 = arith.constant 0 : index
    %25 = vector.load %arg2[%c0_5, %c0_6] : memref<256x32xbf16, #tpu.memory_space<vmem>>, vector<256x32xbf16>
    %cst_7 = arith.constant dense<0.000000e+00> : vector<2x32xf32>
    %26 = tpu.matmul %24, %25, %cst_7 {dimension_numbers = #tpu.dot_dimension_numbers<[1], [0], [0], [1], [0, 0, 1, 1], [], []>} : vector<2x256xbf16>, vector<256x32xbf16>, vector<2x32xf32> -> vector<2x32xf32>
    %c0_8 = arith.constant 0 : index
    %c0_9 = arith.constant 0 : index
    %27 = vector.load %arg3[%c0_8, %c0_9] : memref<1x32xf32, #tpu.memory_space<vmem>>, vector<1x32xf32>
    %28 = vector.broadcast %27 : vector<1x32xf32> to vector<2x32xf32>
    %29 = arith.addf %26, %28 : vector<2x32xf32>
    %cst_10 = arith.constant 0.000000e+00 : f32
    %30 = vector.broadcast %cst_10 : f32 to vector<2x32xf32>
    %31 = arith.maximumf %29, %30 : vector<2x32xf32>
    %c0_11 = arith.constant 0 : index
    %c0_12 = arith.constant 0 : index
    %32 = vector.load %arg4[%c0_11, %c0_12] : memref<8x32xf32, #tpu.memory_space<vmem>>, vector<8x32xf32>
    "tpu.trace_start"() <{level = 10 : i32, message = "oh,bh->ob"}> : () -> ()
    %cst_13 = arith.constant dense<0.000000e+00> : vector<8x2xf32>
    %33 = tpu.matmul %32, %31, %cst_13 {dimension_numbers = #tpu.dot_dimension_numbers<[1], [1], [0], [0], [0, 0, 1, 0], [], []>} : vector<8x32xf32>, vector<2x32xf32>, vector<8x2xf32> -> vector<8x2xf32>
    "tpu.trace_stop"() : () -> ()
    %34 = vector.extract_strided_slice %33 {offsets = [0, 0], sizes = [1, 2], strides = [1, 1]} : vector<8x2xf32> to vector<1x2xf32>
    %c5 = arith.constant 5 : index
    %35 = memref.load %arg5[%c5] : memref<6xf32, #tpu.memory_space<smem>>
    %36 = vector.broadcast %35 : f32 to vector<1x2xf32>
    %37 = arith.addf %34, %36 : vector<1x2xf32>
    %38 = math.tanh %37 : vector<1x2xf32>
    %c0_14 = arith.constant 0 : index
    %c0_15 = arith.constant 0 : index
    %c0_16 = arith.constant 0 : index
    %39 = vector.load %arg6[%c0_14, %c0_15, %c0_16] : memref<1x1x2xf32, #tpu.memory_space<vmem>>, vector<1x1x2xf32>
    %40 = vector.shape_cast %39 : vector<1x1x2xf32> to vector<1x2xf32>
    %41 = vector.shape_cast %38 : vector<1x2xf32> to vector<1x1x2xf32>
    tpu.vector_store %arg6[%c0_14, %c0_15, %c0_16], %41 {strides = array<i32>} : memref<1x1x2xf32, #tpu.memory_space<vmem>>, vector<1x1x2xf32>,
    return
  }
  func.func @transform_0(%arg0: i32) -> (i32, i32) {
    %c0_i32 = arith.constant 0 : i32
    %c0_i32_0 = arith.constant 0 : i32
    return %arg0, %c0_i32 : i32, i32
  }
  func.func @transform_1(%arg0: i32) -> (i32, i32) {
    %c0_i32 = arith.constant 0 : i32
    %c0_i32_0 = arith.constant 0 : i32
    %c0_i32_1 = arith.constant 0 : i32
    return %c0_i32, %c0_i32_0 : i32, i32
  }
  func.func @transform_2(%arg0: i32) -> (i32, i32) {
    %c0_i32 = arith.constant 0 : i32
    %c0_i32_0 = arith.constant 0 : i32
    %c0_i32_1 = arith.constant 0 : i32
    return %c0_i32, %c0_i32_0 : i32, i32
  }
  func.func @transform_3(%arg0: i32) -> (i32, i32) {
    %c0_i32 = arith.constant 0 : i32
    %c0_i32_0 = arith.constant 0 : i32
    %c0_i32_1 = arith.constant 0 : i32
    return %c0_i32, %c0_i32_0 : i32, i32
  }
  func.func @transform_4(%arg0: i32) -> i32 {
    %c0_i32 = arith.constant 0 : i32
    %c0_i32_0 = arith.constant 0 : i32
    return %c0_i32 : i32
  }
  func.func @transform_5(%arg0: i32) -> (i32, i32, i32) {
    %c0_i32 = arith.constant 0 : i32
    %c0_i32_0 = arith.constant 0 : i32
    %c0_i32_1 = arith.constant 0 : i32
    return %arg0, %c0_i32, %c0_i32_0 : i32, i32, i32
  }
}

</mosaic_0001>

<llo_original>
// kernel: tpu_custom_call.1
$region0: #{tpu_custom_call.1}
  #allocation0 [shape = 'u32[]', space=smem, size = 0x4, offset = 0x4, fixed_abs, tag = 'smem constant byte address 0x4 - core index']
  #allocation1 [shape = 'u32[144,128]{1,0:T(1,128)}', space=vmem, size = 0x12000, scoped, tag = 'internal scratch']
  %s0 = inlined_call_operand.vmem [shape: f32[2,1024], index: 0, kind: input, shape index: {}]
  %s1 = inlined_call_operand.vmem [shape: bf16[256,32], index: 1, kind: input, shape index: {}]
  %s2 = inlined_call_operand.vmem [shape: f32[1,32], index: 2, kind: input, shape index: {}]
  %s3 = inlined_call_operand.vmem [shape: f32[8,32], index: 3, kind: input, shape index: {}]
  %s4 = inlined_call_operand.vmem [shape: f32[6], index: 4, kind: input, shape index: {}]
  %s5 = inlined_call_operand.hbm [shape: f32[1,1,2], index: 5, kind: output, shape index: {}]
  %s6 = sld [smem:[#allocation0]]
  $region34: #{tpu_custom_call.1} parent=0
    _
  %s8 = ssub.s32 1, %s6
  %s9 = scalar_select 0, %s8, %s6
  $region1: #{tpu_custom_call.1} parent=0
    #allocation2 [shape = 'u8[512]{0}', space=smem, size = 0x200, scoped, tag = 'input window, operand 4, single buffered']
    #allocation3 [shape = 's32[1]{0}', space=sflag, size = 0x4, scoped, tag = 'scoped memory for tpu_custom_call.1']
    #allocation4 [shape = 's32[1]{0}', space=sflag, size = 0x4, scoped, tag = 'scoped memory for tpu_custom_call.1']
    #allocation5 [shape = 'u8[512]{0}', space=vmem, size = 0x400, scoped, tag = 'output window, operand 0, single buffered']
    %10 = vsyncpa [#allocation4], 0
    %11 = vsyncpa [#allocation3], 0
    // Predicated region
    $region2: #{tpu_custom_call.1} parent=1 // pred_check
      _
    $region3: #{tpu_custom_call.1} parent=1 // pred_check_branch
      %13 = sbr.rel (0) target = $region5
    $region4: #{tpu_custom_call.1} parent=1 // pred_region
      _
    $region5: #{tpu_custom_call.1} parent=1 // pred_fallthru
      _
    // Predicated region
    $region6: #{tpu_custom_call.1} parent=1 // pred_check
      _
    $region7: #{tpu_custom_call.1} parent=1 // pred_check_branch
      %15 = sbr.rel (0) target = $region9
    $region8: #{tpu_custom_call.1} parent=1 // pred_region
      _
    $region9: #{tpu_custom_call.1} parent=1 // pred_fallthru
      _
    // Predicated region
    $region10: #{tpu_custom_call.1} parent=1 // pred_check
      _
    $region11: #{tpu_custom_call.1} parent=1 // pred_check_branch
      %17 = sbr.rel (0) target = $region13
    $region12: #{tpu_custom_call.1} parent=1 // pred_region
      _
    $region13: #{tpu_custom_call.1} parent=1 // pred_fallthru
      _
    // Predicated region
    $region14: #{tpu_custom_call.1} parent=1 // pred_check
      _
    $region15: #{tpu_custom_call.1} parent=1 // pred_check_branch
      %19 = sbr.rel (0) target = $region17
    $region16: #{tpu_custom_call.1} parent=1 // pred_region
      _
    $region17: #{tpu_custom_call.1} parent=1 // pred_fallthru
      _
    // Predicated region
    $region18: #{tpu_custom_call.1} parent=1 // pred_check
      _
    $region19: #{tpu_custom_call.1} parent=1 // pred_check_branch
      %21 = sbr.rel (0) target = $region21
    $region20: #{tpu_custom_call.1} parent=1 // pred_region
      %s23 = ssub.s32 16, 16
      %24 = vsyncadd [#allocation4], %s23
      %s26 = sshll.u32 %s4, 4
      %s27 = int_to_ptr.vmem [resolvable:$true] %s26
      %29 = dma.vmem_to_smem %s27, 16, [#allocation2], [#allocation4]
    $region21: #{tpu_custom_call.1} parent=1 // pred_fallthru
      _
    // Predicated region
    $region22: #{tpu_custom_call.1} parent=1 // pred_check
      _
    $region23: #{tpu_custom_call.1} parent=1 // pred_check_branch
      %31 = sbr.rel (0) target = $region25
    $region24: #{tpu_custom_call.1} parent=1 // pred_region
      %32 = dma.done [#allocation4], 16
    $region25: #{tpu_custom_call.1} parent=1 // pred_fallthru
      _
    %33 = sfence
    %v35 = vld [vmem:[%s0] sm:$0xf]
    %s36 = sld [smem:[#allocation2]]
    %v37 = vstv %s36
    %v38 = vmul.f32 %v35, %v37
    %v39 = vld [vmem:[%s0 + $0x4] sm:$0xf]
    %s40 = sld [smem:[#allocation2 + $0x1]]
    %v41 = vstv %s40
    %v42 = vmul.f32 %v39, %v41
    %v43 = vadd.f32 %v38, %v42
    %v44 = vld [vmem:[%s0 + $0x8] sm:$0xf]
    %s45 = sld [smem:[#allocation2 + $0x2]]
    %v46 = vstv %s45
    %v47 = vmul.f32 %v44, %v46
    %v48 = vadd.f32 %v43, %v47
    %v49 = vld [vmem:[%s0 + $0xc] sm:$0xf]
    %s50 = sld [smem:[#allocation2 + $0x3]]
    %v51 = vstv %s50
    %v52 = vmul.f32 %v49, %v51
    %v53 = vadd.f32 %v48, %v52
    %s54 = sld [smem:[#allocation2 + $0x4]]
    %v55 = vstv %s54
    %v56 = vadd.f32 %v53, %v55
    %v57 = vmax.f32 %v56, 0.0
    %v60 = vunpack.c.l.s4 1983009808
    %v61 = vunpack.c.0.s8 %v60
    %v62 = vlaneseq
    %v63 = vshrl.u32 %v62, 7
    %v64 = vsub.s32 %v61, %v63
    %v65 = vrot.slane %v57, %v64
    %v66 = vcombine.high %v65, %v65
    %v69 = vpack.c.bf16 %v65, %v65
    %v70 = vpack.c.bf16 %v66, %v66
    %v71 = vld [vmem:[%s1] sm:$0xf]
    %v72 = vld [vmem:[%s1 + $0x4] sm:$0xf]
    %v73 = vld [vmem:[%s1 + $0x8] sm:$0xf]
    %v74 = vld [vmem:[%s1 + $0xc] sm:$0xf]
    %v75 = vld [vmem:[%s1 + $0x10] sm:$0xf]
    %v76 = vld [vmem:[%s1 + $0x14] sm:$0xf]
    %v77 = vld [vmem:[%s1 + $0x18] sm:$0xf]
    %v78 = vld [vmem:[%s1 + $0x1c] sm:$0xf]
    %v79 = vld [vmem:[%s1 + $0x20] sm:$0xf]
    %v80 = vld [vmem:[%s1 + $0x24] sm:$0xf]
    %v81 = vld [vmem:[%s1 + $0x28] sm:$0xf]
    %v82 = vld [vmem:[%s1 + $0x2c] sm:$0xf]
    %v83 = vld [vmem:[%s1 + $0x30] sm:$0xf]
    %v84 = vld [vmem:[%s1 + $0x34] sm:$0xf]
    %v85 = vld [vmem:[%s1 + $0x38] sm:$0xf]
    %v86 = vld [vmem:[%s1 + $0x3c] sm:$0xf]
    %v87 = vld [vmem:[%s1 + $0x40] sm:$0xf]
    %v88 = vld [vmem:[%s1 + $0x44] sm:$0xf]
    %v89 = vld [vmem:[%s1 + $0x48] sm:$0xf]
    %v90 = vld [vmem:[%s1 + $0x4c] sm:$0xf]
    %v91 = vld [vmem:[%s1 + $0x50] sm:$0xf]
    %v92 = vld [vmem:[%s1 + $0x54] sm:$0xf]
    %v93 = vld [vmem:[%s1 + $0x58] sm:$0xf]
    %v94 = vld [vmem:[%s1 + $0x5c] sm:$0xf]
    %v95 = vld [vmem:[%s1 + $0x60] sm:$0xf]
    %v96 = vld [vmem:[%s1 + $0x64] sm:$0xf]
    %v97 = vld [vmem:[%s1 + $0x68] sm:$0xf]
    %v98 = vld [vmem:[%s1 + $0x6c] sm:$0xf]
    %v99 = vld [vmem:[%s1 + $0x70] sm:$0xf]
    %v100 = vld [vmem:[%s1 + $0x74] sm:$0xf]
    %v101 = vld [vmem:[%s1 + $0x78] sm:$0xf]
    %v102 = vld [vmem:[%s1 + $0x7c] sm:$0xf]
    %v103 = vld [vmem:[%s2] sm:$0x1]
    %v105 = vlaneseq
    %v106 = vshrl.u32 %v105, 7
    %v107 = vsub.s32 0, %v106
    %v108 = vrot.slane %v103, %v107
    %v142 = vunpack.c.l.b16 %v71
    %v143 = vunpack.c.l.b16 %v72
    %v144 = vunpack.c.l.b16 %v73
    %v145 = vunpack.c.l.b16 %v74
    %v146 = vunpack.c.l.b16 %v75
    %v147 = vunpack.c.l.b16 %v76
    %v148 = vunpack.c.l.b16 %v77
    %v149 = vunpack.c.l.b16 %v78
    %v150 = vunpack.c.l.b16 %v79
    %v151 = vunpack.c.l.b16 %v80
    %v152 = vunpack.c.l.b16 %v81
    %v153 = vunpack.c.l.b16 %v82
    %v154 = vunpack.c.l.b16 %v83
    %v155 = vunpack.c.l.b16 %v84
    %v156 = vunpack.c.l.b16 %v85
    %v157 = vunpack.c.l.b16 %v86
    %v158 = vunpack.c.l.b16 %v87
    %v159 = vunpack.c.l.b16 %v88
    %v160 = vunpack.c.l.b16 %v89
    %v161 = vunpack.c.l.b16 %v90
    %v162 = vunpack.c.l.b16 %v91
    %v163 = vunpack.c.l.b16 %v92
    %v164 = vunpack.c.l.b16 %v93
    %v165 = vunpack.c.l.b16 %v94
    %v166 = vunpack.c.l.b16 %v95
    %v167 = vunpack.c.l.b16 %v96
    %v168 = vunpack.c.l.b16 %v97
    %v169 = vunpack.c.l.b16 %v98
    %v170 = vunpack.c.l.b16 %v99
    %v171 = vunpack.c.l.b16 %v100
    %v172 = vunpack.c.l.b16 %v101
    %v173 = vunpack.c.l.b16 %v102
    %v174 = vpack.c.b16 %v143, %v142
    %v175 = vpack.c.b16 %v145, %v144
    %v176 = vpack.c.b16 %v147, %v146
    %v177 = vpack.c.b16 %v149, %v148
    %v178 = vpack.c.b16 %v151, %v150
    %v179 = vpack.c.b16 %v153, %v152
    %v180 = vpack.c.b16 %v155, %v154
    %v181 = vpack.c.b16 %v157, %v156
    %v182 = vpack.c.b16 %v159, %v158
    %v183 = vpack.c.b16 %v161, %v160
    %v184 = vpack.c.b16 %v163, %v162
    %v185 = vpack.c.b16 %v165, %v164
    %v186 = vpack.c.b16 %v167, %v166
    %v187 = vpack.c.b16 %v169, %v168
    %v188 = vpack.c.b16 %v171, %v170
    %v189 = vpack.c.b16 %v173, %v172
    %206 = vmatprep.subr.bf16.mxu0 0
    %207 = vmatpush1.bf16.msra.mxu0 %v174
    %208 = vmatprep.subr.bf16.mxu0 0
    %209 = vmatpush1.bf16.msra.mxu0 %v175
    %210 = vmatprep.subr.bf16.mxu0 0
    %211 = vmatpush1.bf16.msra.mxu0 %v176
    %212 = vmatprep.subr.bf16.mxu0 0
    %213 = vmatpush1.bf16.msra.mxu0 %v177
    %214 = vmatprep.subr.bf16.mxu0 0
    %215 = vmatpush1.bf16.msra.mxu0 %v178
    %216 = vmatprep.subr.bf16.mxu0 0
    %217 = vmatpush1.bf16.msra.mxu0 %v179
    %218 = vmatprep.subr.bf16.mxu0 0
    %219 = vmatpush1.bf16.msra.mxu0 %v180
    %220 = vmatprep.subr.bf16.mxu0 0
    %221 = vmatpush1.bf16.msra.mxu0 %v181
    %222 = vmatprep.subr.bf16.mxu0 0
    %223 = vmatpush1.bf16.msra.mxu0 %v182
    %224 = vmatprep.subr.bf16.mxu0 0
    %225 = vmatpush1.bf16.msra.mxu0 %v183
    %226 = vmatprep.subr.bf16.mxu0 0
    %227 = vmatpush1.bf16.msra.mxu0 %v184
    %228 = vmatprep.subr.bf16.mxu0 0
    %229 = vmatpush1.bf16.msra.mxu0 %v185
    %230 = vmatprep.subr.bf16.mxu0 0
    %231 = vmatpush1.bf16.msra.mxu0 %v186
    %232 = vmatprep.subr.bf16.mxu0 0
    %233 = vmatpush1.bf16.msra.mxu0 %v187
    %234 = vmatprep.subr.bf16.mxu0 0
    %235 = vmatpush1.bf16.msra.mxu0 %v188
    %236 = vmatprep.subr.bf16.mxu0 0
    %237 = vmatpush1.bf16.msra.mxu0 %v189
    %238 = vmatprep.mubr.bf16.mxu0 %v70
    %239 = vmatmul.mubr.bf16.gmra.mrb[0].mxu0 %v69
    %v240 = vpop.f32.mrb[0].mxu0
    %v241 = vadd.f32 %v108, %v240
    %v242 = vpop.f32.mrb[0].mxu0
    %v243 = vpop.f32.mrb[0].mxu0
    %v244 = vpop.f32.mrb[0].mxu0
    %245 = vdwg.mxu0
    %v246 = vmax.f32 %v241, 0.0
    %v247 = vld [vmem:[%s3] sm:$0xff]
    %vm248 = vcmask 261120
    %v250 = vsel %vm248, %v247, 0
    %v253 = vsel %vm248, %v246, 0
    %255 = vmatprep.subr.mxu0 0.0
    %256 = vmatpush1.xpose.msra.mxu0 %v253
    %257 = vmatprep.subr.mxu0 0.0
    %258 = vmatpush1.xpose.msra.mxu0 0.0
    %259 = vmatprep.subr.mxu0 0.0
    %260 = vmatpush1.xpose.msra.mxu0 0.0
    %261 = vmatprep.subr.mxu0 0.0
    %262 = vmatpush1.xpose.msra.mxu0 0.0
    %263 = vmatprep.subr.mxu0 0.0
    %264 = vmatpush1.xpose.msra.mxu0 0.0
    %265 = vmatprep.subr.mxu0 0.0
    %266 = vmatpush1.xpose.msra.mxu0 0.0
    %267 = vmatprep.subr.mxu0 0.0
    %268 = vmatpush1.xpose.msra.mxu0 0.0
    %269 = vmatprep.subr.mxu0 0.0
    %270 = vmatpush1.xpose.msra.mxu0 0.0
    %271 = vmatprep.subr.mxu0 0.0
    %272 = vmatpush1.xpose.msra.mxu0 0.0
    %273 = vmatprep.subr.mxu0 0.0
    %274 = vmatpush1.xpose.msra.mxu0 0.0
    %275 = vmatprep.subr.mxu0 0.0
    %276 = vmatpush1.xpose.msra.mxu0 0.0
    %277 = vmatprep.subr.mxu0 0.0
    %278 = vmatpush1.xpose.msra.mxu0 0.0
    %279 = vmatprep.subr.mxu0 0.0
    %280 = vmatpush1.xpose.msra.mxu0 0.0
    %281 = vmatprep.subr.mxu0 0.0
    %282 = vmatpush1.xpose.msra.mxu0 0.0
    %283 = vmatprep.subr.mxu0 0.0
    %284 = vmatpush1.xpose.msra.mxu0 0.0
    %285 = vmatprep.subr.mxu0 0.0
    %286 = vmatpush1.xpose.msra.mxu0 0.0
    %287 = vmatprep.subr.mxu0 0.0
    %288 = vmatpush1.xpose.msra.mxu0 0.0
    %289 = vmatprep.subr.mxu0 0.0
    %290 = vmatpush1.xpose.msra.mxu0 0.0
    %291 = vmatprep.subr.mxu0 0.0
    %292 = vmatpush1.xpose.msra.mxu0 0.0
    %293 = vmatprep.subr.mxu0 0.0
    %294 = vmatpush1.xpose.msra.mxu0 0.0
    %295 = vmatprep.subr.mxu0 0.0
    %296 = vmatpush1.xpose.msra.mxu0 0.0
    %297 = vmatprep.subr.mxu0 0.0
    %298 = vmatpush1.xpose.msra.mxu0 0.0
    %299 = vmatprep.subr.mxu0 0.0
    %300 = vmatpush1.xpose.msra.mxu0 0.0
    %301 = vmatprep.subr.mxu0 0.0
    %302 = vmatpush1.xpose.msra.mxu0 0.0
    %303 = vmatprep.subr.mxu0 0.0
    %304 = vmatpush1.xpose.msra.mxu0 0.0
    %305 = vmatprep.subr.mxu0 0.0
    %306 = vmatpush1.xpose.msra.mxu0 0.0
    %307 = vmatprep.subr.mxu0 0.0
    %308 = vmatpush1.xpose.msra.mxu0 0.0
    %309 = vmatprep.subr.mxu0 0.0
    %310 = vmatpush1.xpose.msra.mxu0 0.0
    %311 = vmatprep.subr.mxu0 0.0
    %312 = vmatpush1.xpose.msra.mxu0 0.0
    %313 = vmatprep.subr.mxu0 0.0
    %314 = vmatpush1.xpose.msra.mxu0 0.0
    %315 = vmatprep.subr.mxu0 0.0
    %316 = vmatpush1.xpose.msra.mxu0 0.0
    %317 = vmatprep.subr.mxu0 0.0
    %318 = vmatpush1.xpose.msra.mxu0 0.0
    %319 = vmatprep.mubr.f32.mxu0 0.0
    %320 = vmatmul.mubr.f32.gmra.mrb[0].mxu0 %v250
    %v321 = vpop.f32.mrb[0].mxu0
    %v322 = vadd.f32 0.0, %v321
    %v323 = vpop.f32.mrb[0].mxu0
    %324 = vdwg.mxu0
    %s325 = sld [smem:[#allocation2 + $0x5]]
    %v326 = vstv %s325
    %v327 = vadd.f32 %v322, %v326
    %v328 = vtanh.pop %v327
    %vm329 = vcmask 8192
    %330 = vst.msk [vmem:[#allocation5] sm:$0x1] %vm329, %v328
    // Predicated region
    $region26: #{tpu_custom_call.1} parent=1 // pred_check
      _
    $region27: #{tpu_custom_call.1} parent=1 // pred_check_branch
      %332 = sbr.rel (0) target = $region29
    $region28: #{tpu_custom_call.1} parent=1 // pred_region
      %s334 = ssub.s32 16, 16
      %335 = vsyncadd [#allocation3], %s334
      %s337 = sshll.u32 [#allocation5], 4
      %s338 = int_to_ptr.vmem [resolvable:$true] %s337
      %340 = dma.vmem_to_hbm [thread:$0]  %s338, 16, %s5, [#allocation3]
    $region29: #{tpu_custom_call.1} parent=1 // pred_fallthru
      _
    // Predicated region
    $region30: #{tpu_custom_call.1} parent=1 // pred_check
      _
    $region31: #{tpu_custom_call.1} parent=1 // pred_check_branch
      %342 = sbr.rel (0) target = $region33
    $region32: #{tpu_custom_call.1} parent=1 // pred_region
      %343 = dma.done [#allocation3], 16
    $region33: #{tpu_custom_call.1} parent=1 // pred_fallthru
      _
    %344 = vsyncpa [#allocation3], 1
    %345 = vsyncpa [#allocation4], 1

</llo_original>
